<compile_context>
chip_gen: v6e
topology: v6e:2x2x1
jax: 0.10.0
libtpu: 0.0.40
codegen_flags: <defaults>
</compile_context>

<pallas_src>
import jax
import jax.numpy as jnp
import numpy as np
from jax.experimental import pallas as pl
from jax.experimental.pallas import tpu as pltpu


def rgbt_tokenize_kernel(xp_ref, w_ref, cls_ref, pos_ref, out_ref):
    """Single grid step over the whole (tiny) batch.

    xp_ref : (B*N, K)    patchified images, all batches stacked along M
    w_ref  : (K, D)      conv weight reshaped/transposed
    cls_ref: (1, D)      cls_token + pos_embed[0]        (pre-fused constant)
    pos_ref: (N, D)      pos_embed[1:] + conv bias       (pre-fused constant)
    out_ref: (B, N+1, D) output tokens
    """
    B, n_tok, _ = out_ref.shape
    N = n_tok - 1

    # One MXU matmul for the whole batch: (B*N, K) @ (K, D) -> (B*N, D), f32 accumulate.
    proj = jnp.dot(xp_ref[...], w_ref[...], preferred_element_type=jnp.float32)

    cls_row = cls_ref[...]          # (1, D)
    pos = pos_ref[...]              # (N, D)

    # Direct slice stores: no concatenate, no (N+1, D) unaligned intermediate.
    # B is tiny, so a static unroll is just 2*B slice stores.
    for b in range(B):
        out_ref[b, 0:1, :] = cls_row
        out_ref[b, 1:N + 1, :] = proj[b * N:(b + 1) * N, :] + pos


def rgbt_processor_forward(x_nchw, conv_w, conv_b, cls_tokens, pos_embed, patch):
    """Returns {'trunk': {'tokens': (B, N+1, D)}, 'head': {}} like the nn.Module."""
    B, C, H, W = x_nchw.shape
    D = conv_w.shape[0]
    p = patch
    nH, nW = H // p, W // p
    N = nH * nW
    K = C * p * p

    # --- glue: patchify NCHW -> (B*N, K), inner order (c, kh, kw) == stride-p Conv2d ---
    # TODO(synk): patchification stays in the XLA wrapper; Mosaic has no robust in-kernel
    # lowering for this general 6-D split+permute, and the whole input is only a few KB.
    xp = x_nchw.reshape(B, C, nH, p, nW, p)
    xp = xp.transpose(0, 2, 4, 1, 3, 5)                 # (B, nH, nW, C, p, p)
    xp = xp.reshape(B * N, K).astype(jnp.float32)       # (B*N, K)

    w_mat = conv_w.reshape(D, K).T.astype(jnp.float32)  # (K, D)

    # Fuse batch-independent constants once (removes per-token adds + an operand stream).
    cls_fused = (cls_tokens[:, 0, :] + pos_embed[:, 0, :]).astype(jnp.float32)   # (1, D)
    pos_fused = (pos_embed[0, 1:, :] + conv_b[None, :]).astype(jnp.float32)      # (N, D)

    out = pl.pallas_call(
        rgbt_tokenize_kernel,
        out_shape=jax.ShapeDtypeStruct((B, N + 1, D), jnp.float32),
        grid_spec=pl.GridSpec(
            grid=(1,),
            in_specs=[
                pl.BlockSpec((B * N, K), lambda i: (0, 0)),
                pl.BlockSpec((K, D), lambda i: (0, 0)),
                pl.BlockSpec((1, D), lambda i: (0, 0)),
                pl.BlockSpec((N, D), lambda i: (0, 0)),
            ],
            out_specs=pl.BlockSpec((B, N + 1, D), lambda i: (0, 0, 0)),
        ),
        compiler_params=pltpu.CompilerParams(
            dimension_semantics=("arbitrary",)),
    )(xp, w_mat, cls_fused, pos_fused)

    return {"trunk": {"tokens": out}, "head": {}}


def _reference(x_nchw, conv_w, conv_b, cls_tokens, pos_embed, patch):
    """Plain-JAX reference of the PyTorch forward (for verification)."""
    B, C, H, W = x_nchw.shape
    D = conv_w.shape[0]
    p = patch
    nH, nW = H // p, W // p
    N = nH * nW
    K = C * p * p
    xp = x_nchw.reshape(B, C, nH, p, nW, p).transpose(0, 2, 4, 1, 3, 5).reshape(B, N, K)
    proj = xp @ conv_w.reshape(D, K).T + conv_b[None, None, :]        # (B, N, D)
    cls = jnp.broadcast_to(cls_tokens, (B, 1, D))
    tok = jnp.concatenate([cls, proj], axis=1) + pos_embed            # (B, N+1, D)
    return tok


if __name__ == "__main__":
    # Small deterministic config
    B, C, H, W = 2, 4, 16, 16
    patch = 4
    D = 32
    N = (H // patch) * (W // patch)   # 16
    K = C * patch * patch             # 64

    key = jax.random.PRNGKey(0)
    k_x, k_w, k_b, k_cls, k_pos = jax.random.split(key, 5)

    x = jax.random.normal(k_x, (B, C, H, W), dtype=jnp.float32)
    # Conv2d(C, D, kernel=patch, stride=patch) parameters
    conv_w = jax.random.normal(k_w, (D, C, patch, patch), dtype=jnp.float32) * 0.05
    conv_b = jax.random.normal(k_b, (D,), dtype=jnp.float32) * 0.05
    # cls_tokens: 'openclip' style init (normal * D^-0.5)
    cls_tokens = jax.random.normal(k_cls, (1, 1, D), dtype=jnp.float32) * (D ** -0.5)
    # learnable pos_embed: trunc_normal std=0.02 (plain normal here; synthetic)
    pos_embed = jax.random.normal(k_pos, (1, N + 1, D), dtype=jnp.float32) * 0.02

    out = rgbt_processor_forward(x, conv_w, conv_b, cls_tokens, pos_embed, patch)
    tokens = jax.block_until_ready(out["trunk"]["tokens"])

    ref = _reference(x, conv_w, conv_b, cls_tokens, pos_embed, patch)
    assert tokens.shape == (B, N + 1, D)
    np.testing.assert_allclose(np.asarray(tokens), np.asarray(ref), rtol=1e-5, atol=1e-5)

    print("KERNEL_OK")
</pallas_src>

<mosaic_0001>
module attributes {stable_mosaic.version = 11 : i64} {
  func.func @rgbt_tokenize_kernel(%arg0: i32, %arg1: memref<32x64xf32, #tpu.memory_space<vmem>>, %arg2: memref<64x32xf32, #tpu.memory_space<vmem>>, %arg3: memref<1x32xf32, #tpu.memory_space<vmem>>, %arg4: memref<16x32xf32, #tpu.memory_space<vmem>>, %arg5: memref<2x17x32xf32, #tpu.memory_space<vmem>>) attributes {dimension_semantics = [#tpu.dimension_semantics<arbitrary>], iteration_bounds = array<i64: 1>, scalar_prefetch = 0 : i64, scratch_operands = 0 : i64, tpu.core_type = #tpu.core_type<tc>, window_params = [{pipeline_mode = #tpu.pipeline_mode<synchronous>, transform_indices = @transform_0, window_bounds = array<i64: 32, 64>}, {pipeline_mode = #tpu.pipeline_mode<synchronous>, transform_indices = @transform_1, window_bounds = array<i64: 64, 32>}, {pipeline_mode = #tpu.pipeline_mode<synchronous>, transform_indices = @transform_2, window_bounds = array<i64: 1, 32>}, {pipeline_mode = #tpu.pipeline_mode<synchronous>, transform_indices = @transform_3, window_bounds = array<i64: 16, 32>}, {pipeline_mode = #tpu.pipeline_mode<synchronous>, transform_indices = @transform_4, window_bounds = array<i64: 2, 17, 32>}]} {
    %c0 = arith.constant 0 : index
    %c0_0 = arith.constant 0 : index
    %0 = vector.load %arg1[%c0, %c0_0] : memref<32x64xf32, #tpu.memory_space<vmem>>, vector<32x64xf32>
    %c0_1 = arith.constant 0 : index
    %c0_2 = arith.constant 0 : index
    %1 = vector.load %arg2[%c0_1, %c0_2] : memref<64x32xf32, #tpu.memory_space<vmem>>, vector<64x32xf32>
    %cst = arith.constant dense<0.000000e+00> : vector<32x32xf32>
    %2 = tpu.matmul %0, %1, %cst {dimension_numbers = #tpu.dot_dimension_numbers<[1], [0], [0], [1], [0, 0, 1, 1], [], []>} : vector<32x64xf32>, vector<64x32xf32>, vector<32x32xf32> -> vector<32x32xf32>
    %c0_3 = arith.constant 0 : index
    %c0_4 = arith.constant 0 : index
    %3 = vector.load %arg3[%c0_3, %c0_4] : memref<1x32xf32, #tpu.memory_space<vmem>>, vector<1x32xf32>
    %c0_5 = arith.constant 0 : index
    %c0_6 = arith.constant 0 : index
    %4 = vector.load %arg4[%c0_5, %c0_6] : memref<16x32xf32, #tpu.memory_space<vmem>>, vector<16x32xf32>
    %c0_7 = arith.constant 0 : index
    %c0_8 = arith.constant 0 : index
    %c0_9 = arith.constant 0 : index
    %5 = vector.load %arg5[%c0_7, %c0_8, %c0_9] : memref<2x17x32xf32, #tpu.memory_space<vmem>>, vector<1x1x32xf32>
    %6 = vector.shape_cast %5 : vector<1x1x32xf32> to vector<1x32xf32>
    %7 = vector.shape_cast %3 : vector<1x32xf32> to vector<1x1x32xf32>
    tpu.vector_store %arg5[%c0_7, %c0_8, %c0_9], %7 {strides = array<i32>} : memref<2x17x32xf32, #tpu.memory_space<vmem>>, vector<1x1x32xf32>,
    %8 = vector.extract_strided_slice %2 {offsets = [0, 0], sizes = [16, 32], strides = [1, 1]} : vector<32x32xf32> to vector<16x32xf32>
    %9 = arith.addf %8, %4 : vector<16x32xf32>
    %c0_10 = arith.constant 0 : index
    %c1 = arith.constant 1 : index
    %c0_11 = arith.constant 0 : index
    %10 = vector.load %arg5[%c0_10, %c1, %c0_11] : memref<2x17x32xf32, #tpu.memory_space<vmem>>, vector<1x16x32xf32>
    %11 = vector.shape_cast %10 : vector<1x16x32xf32> to vector<16x32xf32>
    %12 = vector.shape_cast %9 : vector<16x32xf32> to vector<1x16x32xf32>
    tpu.vector_store %arg5[%c0_10, %c1, %c0_11], %12 {strides = array<i32>} : memref<2x17x32xf32, #tpu.memory_space<vmem>>, vector<1x16x32xf32>,
    %c1_12 = arith.constant 1 : index
    %c0_13 = arith.constant 0 : index
    %c0_14 = arith.constant 0 : index
    %13 = vector.load %arg5[%c1_12, %c0_13, %c0_14] : memref<2x17x32xf32, #tpu.memory_space<vmem>>, vector<1x1x32xf32>
    %14 = vector.shape_cast %13 : vector<1x1x32xf32> to vector<1x32xf32>
    %15 = vector.shape_cast %3 : vector<1x32xf32> to vector<1x1x32xf32>
    tpu.vector_store %arg5[%c1_12, %c0_13, %c0_14], %15 {strides = array<i32>} : memref<2x17x32xf32, #tpu.memory_space<vmem>>, vector<1x1x32xf32>,
    %16 = vector.extract_strided_slice %2 {offsets = [16, 0], sizes = [16, 32], strides = [1, 1]} : vector<32x32xf32> to vector<16x32xf32>
    %17 = arith.addf %16, %4 : vector<16x32xf32>
    %c1_15 = arith.constant 1 : index
    %c1_16 = arith.constant 1 : index
    %c0_17 = arith.constant 0 : index
    %18 = vector.load %arg5[%c1_15, %c1_16, %c0_17] : memref<2x17x32xf32, #tpu.memory_space<vmem>>, vector<1x16x32xf32>
    %19 = vector.shape_cast %18 : vector<1x16x32xf32> to vector<16x32xf32>
    %20 = vector.shape_cast %17 : vector<16x32xf32> to vector<1x16x32xf32>
    tpu.vector_store %arg5[%c1_15, %c1_16, %c0_17], %20 {strides = array<i32>} : memref<2x17x32xf32, #tpu.memory_space<vmem>>, vector<1x16x32xf32>,
    return
  }
  func.func @transform_0(%arg0: i32) -> (i32, i32) {
    %c0_i32 = arith.constant 0 : i32
    %c0_i32_0 = arith.constant 0 : i32
    %c0_i32_1 = arith.constant 0 : i32
    return %c0_i32, %c0_i32_0 : i32, i32
  }
  func.func @transform_1(%arg0: i32) -> (i32, i32) {
    %c0_i32 = arith.constant 0 : i32
    %c0_i32_0 = arith.constant 0 : i32
    %c0_i32_1 = arith.constant 0 : i32
    return %c0_i32, %c0_i32_0 : i32, i32
  }
  func.func @transform_2(%arg0: i32) -> (i32, i32) {
    %c0_i32 = arith.constant 0 : i32
    %c0_i32_0 = arith.constant 0 : i32
    %c0_i32_1 = arith.constant 0 : i32
    return %c0_i32, %c0_i32_0 : i32, i32
  }
  func.func @transform_3(%arg0: i32) -> (i32, i32) {
    %c0_i32 = arith.constant 0 : i32
    %c0_i32_0 = arith.constant 0 : i32
    %c0_i32_1 = arith.constant 0 : i32
    return %c0_i32, %c0_i32_0 : i32, i32
  }
  func.func @transform_4(%arg0: i32) -> (i32, i32, i32) {
    %c0_i32 = arith.constant 0 : i32
    %c0_i32_0 = arith.constant 0 : i32
    %c0_i32_1 = arith.constant 0 : i32
    %c0_i32_2 = arith.constant 0 : i32
    return %c0_i32, %c0_i32_0, %c0_i32_1 : i32, i32, i32
  }
}

</mosaic_0001>

<llo_original>
// kernel: tpu_custom_call.1
$region0: #{tpu_custom_call.1}
  #allocation0 [shape = 'u32[]', space=smem, size = 0x4, offset = 0x4, fixed_abs, tag = 'smem constant byte address 0x4 - core index']
  #allocation1 [shape = 'u32[144,128]{1,0:T(1,128)}', space=vmem, size = 0x12000, scoped, tag = 'internal scratch']
  %s0 = inlined_call_operand.vmem [shape: f32[32,64], index: 0, kind: input, shape index: {}]
  %s1 = inlined_call_operand.vmem [shape: f32[64,32], index: 1, kind: input, shape index: {}]
  %s2 = inlined_call_operand.vmem [shape: f32[1,32], index: 2, kind: input, shape index: {}]
  %s3 = inlined_call_operand.vmem [shape: f32[16,32], index: 3, kind: input, shape index: {}]
  %s4 = inlined_call_operand.vmem [shape: f32[2,17,32], index: 4, kind: output, shape index: {}]
  %s5 = sld [smem:[#allocation0]]
  $region26: #{tpu_custom_call.1} parent=0
    _
  %s7 = ssub.s32 1, %s5
  %s8 = scalar_select 0, %s7, %s5
  // Predicated region
  $region2: #{tpu_custom_call.1} parent=0 // pred_check
    _
  $region3: #{tpu_custom_call.1} parent=0 // pred_check_branch
    %10 = sbr.rel (0) target = $region5
  $region4: #{tpu_custom_call.1} parent=0 // pred_region
    _
  $region5: #{tpu_custom_call.1} parent=0 // pred_fallthru
    _
  // Predicated region
  $region6: #{tpu_custom_call.1} parent=0 // pred_check
    _
  $region7: #{tpu_custom_call.1} parent=0 // pred_check_branch
    %12 = sbr.rel (0) target = $region9
  $region8: #{tpu_custom_call.1} parent=0 // pred_region
    _
  $region9: #{tpu_custom_call.1} parent=0 // pred_fallthru
    _
  // Predicated region
  $region10: #{tpu_custom_call.1} parent=0 // pred_check
    _
  $region11: #{tpu_custom_call.1} parent=0 // pred_check_branch
    %14 = sbr.rel (0) target = $region13
  $region12: #{tpu_custom_call.1} parent=0 // pred_region
    _
  $region13: #{tpu_custom_call.1} parent=0 // pred_fallthru
    _
  // Predicated region
  $region14: #{tpu_custom_call.1} parent=0 // pred_check
    _
  $region15: #{tpu_custom_call.1} parent=0 // pred_check_branch
    %16 = sbr.rel (0) target = $region17
  $region16: #{tpu_custom_call.1} parent=0 // pred_region
    _
  $region17: #{tpu_custom_call.1} parent=0 // pred_fallthru
    _
  %v17 = vld [vmem:[%s0] sm:$0xff]
  %v18 = vld [vmem:[%s0 + $0x8] sm:$0xff]
  %v19 = vld [vmem:[%s0 + $0x10] sm:$0xff]
  %v20 = vld [vmem:[%s0 + $0x18] sm:$0xff]
  %v21 = vld [vmem:[%s1] sm:$0xff]
  %v22 = vld [vmem:[%s1 + $0x8] sm:$0xff]
  %v23 = vld [vmem:[%s1 + $0x10] sm:$0xff]
  %v24 = vld [vmem:[%s1 + $0x18] sm:$0xff]
  %v25 = vld [vmem:[%s1 + $0x20] sm:$0xff]
  %v26 = vld [vmem:[%s1 + $0x28] sm:$0xff]
  %v27 = vld [vmem:[%s1 + $0x30] sm:$0xff]
  %v28 = vld [vmem:[%s1 + $0x38] sm:$0xff]
  %vm29 = vcmask 523264
  %v31 = vsel %vm29, %v17, 0
  %v34 = vsel %vm29, %v18, 0
  %v37 = vsel %vm29, %v19, 0
  %v40 = vsel %vm29, %v20, 0
  %42 = vmatprep.subr.mxu0 0.0
  %43 = vmatpush1.msra.mxu0 0.0
  %44 = vmatprep.subr.mxu0 0.0
  %45 = vmatpush1.msra.mxu0 0.0
  %46 = vmatprep.subr.mxu0 0.0
  %47 = vmatpush1.msra.mxu0 0.0
  %48 = vmatprep.subr.mxu0 0.0
  %49 = vmatpush1.msra.mxu0 0.0
  %50 = vmatprep.subr.mxu0 0.0
  %51 = vmatpush1.msra.mxu0 0.0
  %52 = vmatprep.subr.mxu0 0.0
  %53 = vmatpush1.msra.mxu0 0.0
  %54 = vmatprep.subr.mxu0 0.0
  %55 = vmatpush1.msra.mxu0 0.0
  %56 = vmatprep.subr.mxu0 0.0
  %57 = vmatpush1.msra.mxu0 0.0
  %58 = vmatprep.subr.mxu0 0.0
  %59 = vmatpush1.msra.mxu0 %v28
  %60 = vmatprep.subr.mxu0 0.0
  %61 = vmatpush1.msra.mxu0 %v27
  %62 = vmatprep.subr.mxu0 0.0
  %63 = vmatpush1.msra.mxu0 %v26
  %64 = vmatprep.subr.mxu0 0.0
  %65 = vmatpush1.msra.mxu0 %v25
  %66 = vmatprep.subr.mxu0 0.0
  %67 = vmatpush1.msra.mxu0 %v24
  %68 = vmatprep.subr.mxu0 0.0
  %69 = vmatpush1.msra.mxu0 %v23
  %70 = vmatprep.subr.mxu0 0.0
  %71 = vmatpush1.msra.mxu0 %v22
  %72 = vmatprep.subr.mxu0 0.0
  %73 = vmatpush1.msra.mxu0 %v21
  %74 = vmatprep.subr.mxu0 0.0
  %75 = vmatpush2.msra.mxu0 0.0
  %76 = vmatprep.subr.mxu0 0.0
  %77 = vmatpush2.msra.mxu0 0.0
  %78 = vmatprep.subr.mxu0 0.0
  %79 = vmatpush2.msra.mxu0 0.0
  %80 = vmatprep.subr.mxu0 0.0
  %81 = vmatpush2.msra.mxu0 0.0
  %82 = vmatprep.subr.mxu0 0.0
  %83 = vmatpush2.msra.mxu0 0.0
  %84 = vmatprep.subr.mxu0 0.0
  %85 = vmatpush2.msra.mxu0 0.0
  %86 = vmatprep.subr.mxu0 0.0
  %87 = vmatpush2.msra.mxu0 0.0
  %88 = vmatprep.subr.mxu0 0.0
  %89 = vmatpush2.msra.mxu0 0.0
  %90 = vmatprep.subr.mxu0 0.0
  %91 = vmatpush2.msra.mxu0 0.0
  %92 = vmatprep.subr.mxu0 0.0
  %93 = vmatpush2.msra.mxu0 0.0
  %94 = vmatprep.subr.mxu0 0.0
  %95 = vmatpush2.msra.mxu0 0.0
  %96 = vmatprep.subr.mxu0 0.0
  %97 = vmatpush2.msra.mxu0 0.0
  %98 = vmatprep.subr.mxu0 0.0
  %99 = vmatpush2.msra.mxu0 0.0
  %100 = vmatprep.subr.mxu0 0.0
  %101 = vmatpush2.msra.mxu0 0.0
  %102 = vmatprep.subr.mxu0 0.0
  %103 = vmatpush2.msra.mxu0 0.0
  %104 = vmatprep.subr.mxu0 0.0
  %105 = vmatpush2.msra.mxu0 0.0
  %106 = vmatprep.mubr.f32.mxu0 0.0
  %107 = vmatmul.mubr.f32.gmra.mxu0 %v31
  %v108 = vpop.f32.mrf.mxu0
  %v109 = vadd.f32 0.0, %v108
  %v110 = vpop.f32.mrf.mxu0
  %111 = vmatprep.mubr.f32.mxu0 0.0
  %112 = vmatmul.mubr.f32.gmra.mxu0 %v34
  %v113 = vpop.f32.mrf.mxu0
  %v114 = vadd.f32 0.0, %v113
  %v115 = vpop.f32.mrf.mxu0
  %116 = vmatprep.mubr.f32.mxu0 0.0
  %117 = vmatmul.mubr.f32.gmra.mxu0 %v37
  %v118 = vpop.f32.mrf.mxu0
  %v119 = vadd.f32 0.0, %v118
  %v120 = vpop.f32.mrf.mxu0
  %121 = vmatprep.mubr.f32.mxu0 0.0
  %122 = vmatmul.mubr.f32.gmra.mxu0 %v40
  %v123 = vpop.f32.mrf.mxu0
  %v124 = vadd.f32 0.0, %v123
  %v125 = vpop.f32.mrf.mxu0
  %126 = vdwg.mxu0
  %v127 = vld [vmem:[%s2] sm:$0x1]
  %v128 = vld [vmem:[%s3] sm:$0xff]
  %v129 = vld [vmem:[%s3 + $0x8] sm:$0xff]
  %vm130 = vcmask 253952
  %131 = vst.msk [vmem:[%s4] sm:$0x1] %vm130, %v127
  %v132 = vadd.f32 %v109, %v128
  %v133 = vadd.f32 %v114, %v129
  %vm134 = vcmask 261120
  %135 = vst.msk [vmem:[%s4 + $0x1] sm:$0xff] %vm134, %v132
  %136 = vst.msk [vmem:[%s4 + $0x9] sm:$0xff] %vm134, %v133
  %s137 = scalar_lea.vmem %s4, 24
  %138 = vst.msk [vmem:[%s137] sm:$0x1] %vm130, %v127
  %v139 = vadd.f32 %v119, %v128
  %v140 = vadd.f32 %v124, %v129
  %141 = vst.msk [vmem:[%s137 + $0x1] sm:$0xff] %vm134, %v139
  %142 = vst.msk [vmem:[%s137 + $0x9] sm:$0xff] %vm134, %v140
  // Predicated region
  $region18: #{tpu_custom_call.1} parent=0 // pred_check
    _
  $region19: #{tpu_custom_call.1} parent=0 // pred_check_branch
    %144 = sbr.rel (0) target = $region21
  $region20: #{tpu_custom_call.1} parent=0 // pred_region
    _
  $region21: #{tpu_custom_call.1} parent=0 // pred_fallthru
    _
  // Predicated region
  $region22: #{tpu_custom_call.1} parent=0 // pred_check
    _
  $region23: #{tpu_custom_call.1} parent=0 // pred_check_branch
    %146 = sbr.rel (0) target = $region25
  $region24: #{tpu_custom_call.1} parent=0 // pred_region
    _
  $region25: #{tpu_custom_call.1} parent=0 // pred_fallthru
    _

</llo_original>
